<compile_context>
chip_gen: v7x
topology: tpu7x:2x2x1
jax: 0.10.0
libtpu: 0.0.40
codegen_flags: <defaults>
</compile_context>

<pallas_src>
import jax
import jax.numpy as jnp
from jax.experimental import pallas as pl
from jax.experimental.pallas import tpu as pltpu

EPS = 1e-5                      # nn.LayerNorm default
TARGET_BLOCK_BYTES = 2 << 20    # ~2 MiB f32 working-set per block
MAX_SPATIAL_TILE = 8192
VMEM_LIMIT_BYTES = 48 * 1024 * 1024   # <= ~48 MiB: safe on v7x (64 MiB/TC)


def _round_up(n, m):
    return ((n + m - 1) // m) * m


# ---------------------------------------------------------------------------
# Kernel A: spatial-tiled path (large H*W).  Block view: (C, S_TILE).
# ---------------------------------------------------------------------------
def _layernorm_spatial_kernel(x_ref, g_ref, b_ref, o_ref):
    # x_ref/o_ref: (C, S_TILE)  channels on sublanes, spatial on lanes.
    # g_ref/b_ref: (C, 1)       broadcast along lanes.
    x = x_ref[...].astype(jnp.float32)
    mean = jnp.mean(x, axis=0, keepdims=True)            # (1, S_TILE)
    mean_sq = jnp.mean(x * x, axis=0, keepdims=True)     # (1, S_TILE)
    var = jnp.maximum(mean_sq - mean * mean, 0.0)        # clamp cancellation
    inv = jax.lax.rsqrt(var + EPS)
    y = (x - mean) * inv
    y = y * g_ref[...].astype(jnp.float32) + b_ref[...].astype(jnp.float32)
    o_ref[...] = y.astype(o_ref.dtype)


# ---------------------------------------------------------------------------
# Kernel B: batch-tiled path (small H*W).  Block view: (B_TILE, C, S).
# ---------------------------------------------------------------------------
def _layernorm_batched_kernel(x_ref, g_ref, b_ref, o_ref):
    # x_ref/o_ref: (B_TILE, C, S); g_ref/b_ref: (C, 1)
    x = x_ref[...].astype(jnp.float32)
    mean = jnp.mean(x, axis=1, keepdims=True)            # (B_TILE, 1, S)
    mean_sq = jnp.mean(x * x, axis=1, keepdims=True)
    var = jnp.maximum(mean_sq - mean * mean, 0.0)        # clamp cancellation
    inv = jax.lax.rsqrt(var + EPS)
    g = g_ref[...].astype(jnp.float32)[None]             # (1, C, 1)
    bta = b_ref[...].astype(jnp.float32)[None]           # (1, C, 1)
    y = (x - mean) * inv * g + bta
    o_ref[...] = y.astype(o_ref.dtype)


def _choose_spatial_tile(c_pad, s,
                         target_block_bytes=TARGET_BLOCK_BYTES,
                         max_tile=MAX_SPATIAL_TILE):
    """Lane-dense spatial tile: multiple of 128, ~target f32 block bytes."""
    if s <= 128:
        return s                          # block dim == full array dim: legal
    tile = target_block_bytes // max(1, c_pad * 4)       # f32 working set
    tile = max(128, min(tile, max_tile))
    tile = (tile // 128) * 128            # multiple of 128 lanes (unmasked vst)
    tile = min(tile, (s // 128) * 128)    # never larger than 128-floored extent
    return max(tile, 128)


def layer_norm_proxy(x_nchw, gamma, beta):
    """Equivalent of LayerNormProxy.forward: input/output are NCHW."""
    b, c, h, w = x_nchw.shape
    s = h * w
    x3d = x_nchw.reshape(b, c, s)         # free reshape, no transpose
    g2d = gamma.reshape(c, 1)
    b2d = beta.reshape(c, 1)
    dtype = x_nchw.dtype

    # Honest VMEM accounting: kernel upcasts to f32; pad C to the sublane
    # pack and S to the 128-lane width.
    c_pad = _round_up(c, 8)
    s_pad = _round_up(s, 128)
    per_batch_f32_bytes = c_pad * s_pad * 4

    if per_batch_f32_bytes <= TARGET_BLOCK_BYTES:
        # ---- small-feature-map path: block over the batch axis ------------
        b_tile = max(1, min(b, TARGET_BLOCK_BYTES // per_batch_f32_bytes))
        grid = (pl.cdiv(b, b_tile),)      # partial last batch tile is masked
        y3d = pl.pallas_call(
            _layernorm_batched_kernel,
            out_shape=jax.ShapeDtypeStruct((b, c, s), dtype),
            grid_spec=pltpu.PrefetchScalarGridSpec(
                num_scalar_prefetch=0,
                grid=grid,
                in_specs=[
                    pl.BlockSpec((b_tile, c, s), lambda bi: (bi, 0, 0)),
                    pl.BlockSpec((c, 1), lambda bi: (0, 0)),
                    pl.BlockSpec((c, 1), lambda bi: (0, 0)),
                ],
                out_specs=pl.BlockSpec((b_tile, c, s), lambda bi: (bi, 0, 0)),
            ),
            compiler_params=pltpu.CompilerParams(
                dimension_semantics=("parallel",),
                vmem_limit_bytes=VMEM_LIMIT_BYTES,
            ),
        )(x3d, g2d, b2d)
    else:
        # ---- large-feature-map path: block over the spatial axis ----------
        s_tile = _choose_spatial_tile(c_pad, s)
        grid = (b, pl.cdiv(s, s_tile))    # partial last spatial tile is masked
        y3d = pl.pallas_call(
            _layernorm_spatial_kernel,
            out_shape=jax.ShapeDtypeStruct((b, c, s), dtype),
            grid_spec=pltpu.PrefetchScalarGridSpec(
                num_scalar_prefetch=0,
                grid=grid,
                in_specs=[
                    # batch dim squeezed; kernel sees (C, S_TILE)
                    pl.BlockSpec((None, c, s_tile), lambda bi, si: (bi, 0, si)),
                    pl.BlockSpec((c, 1), lambda bi, si: (0, 0)),
                    pl.BlockSpec((c, 1), lambda bi, si: (0, 0)),
                ],
                out_specs=pl.BlockSpec((None, c, s_tile),
                                       lambda bi, si: (bi, 0, si)),
            ),
            compiler_params=pltpu.CompilerParams(
                dimension_semantics=("parallel", "parallel"),
                vmem_limit_bytes=VMEM_LIMIT_BYTES,
            ),
        )(x3d, g2d, b2d)

    return y3d.reshape(b, c, h, w)


def _reference(x_nchw, gamma, beta):
    mean = jnp.mean(x_nchw, axis=1, keepdims=True)
    var = jnp.mean((x_nchw - mean) ** 2, axis=1, keepdims=True)
    y = (x_nchw - mean) / jnp.sqrt(var + EPS)
    return y * gamma[None, :, None, None] + beta[None, :, None, None]


if __name__ == "__main__":
    key = jax.random.PRNGKey(0)
    kx, kg, kb, kx2, kx3, kg3, kb3 = jax.random.split(key, 7)

    # --- small shape (batch-blocked path) ---------------------------------
    B, C, H, W = 2, 4, 16, 16
    x = jax.random.normal(kx, (B, C, H, W), dtype=jnp.float32)
    gamma = 1.0 + 0.1 * jax.random.normal(kg, (C,), dtype=jnp.float32)
    beta = 0.1 * jax.random.normal(kb, (C,), dtype=jnp.float32)

    y = jax.block_until_ready(layer_norm_proxy(x, gamma, beta))
    ref = _reference(x, gamma, beta)
    assert y.shape == (B, C, H, W)
    assert jnp.max(jnp.abs(y - ref)) < 1e-4

    # --- non-128-divisible spatial extent (typical DAT 14x14 map) ----------
    x2 = jax.random.normal(kx2, (2, C, 14, 14), dtype=jnp.float32)
    y2 = jax.block_until_ready(layer_norm_proxy(x2, gamma, beta))
    ref2 = _reference(x2, gamma, beta)
    assert jnp.max(jnp.abs(y2 - ref2)) < 1e-4

    # --- larger feature map: exercises the spatial-tiled path + masked
    #     partial last tile ---------------------------------------------------
    C3 = 96
    x3 = jax.random.normal(kx3, (2, C3, 80, 80), dtype=jnp.float32)
    gamma3 = 1.0 + 0.1 * jax.random.normal(kg3, (C3,), dtype=jnp.float32)
    beta3 = 0.1 * jax.random.normal(kb3, (C3,), dtype=jnp.float32)
    y3 = jax.block_until_ready(layer_norm_proxy(x3, gamma3, beta3))
    ref3 = _reference(x3, gamma3, beta3)
    assert jnp.max(jnp.abs(y3 - ref3)) < 1e-4

    print("KERNEL_OK")
</pallas_src>

<mosaic_0001>
module attributes {stable_mosaic.version = 11 : i64} {
  func.func @_layernorm_batched_kernel(%arg0: i32, %arg1: memref<2x4x256xf32, #tpu.memory_space<vmem>>, %arg2: memref<4x1xf32, #tpu.memory_space<vmem>>, %arg3: memref<4x1xf32, #tpu.memory_space<vmem>>, %arg4: memref<2x4x256xf32, #tpu.memory_space<vmem>>) attributes {dimension_semantics = [#tpu.dimension_semantics<parallel>], iteration_bounds = array<i64: 1>, scalar_prefetch = 0 : i64, scratch_operands = 0 : i64, tpu.core_type = #tpu.core_type<tc>, window_params = [{transform_indices = @transform_0, window_bounds = array<i64: 2, 4, 256>}, {pipeline_mode = #tpu.pipeline_mode<synchronous>, transform_indices = @transform_1, window_bounds = array<i64: 4, 1>}, {pipeline_mode = #tpu.pipeline_mode<synchronous>, transform_indices = @transform_2, window_bounds = array<i64: 4, 1>}, {transform_indices = @transform_3, window_bounds = array<i64: 2, 4, 256>}]} {
    %c0 = arith.constant 0 : index
    %c0_0 = arith.constant 0 : index
    %c0_1 = arith.constant 0 : index
    %0 = vector.load %arg1[%c0, %c0_0, %c0_1] : memref<2x4x256xf32, #tpu.memory_space<vmem>>, vector<2x4x256xf32>
    %cst = arith.constant dense<0.000000e+00> : vector<2x256xf32>
    %1 = vector.multi_reduction <add>, %0, %cst [1] : vector<2x4x256xf32> to vector<2x256xf32>
    %2 = vector.shape_cast %1 : vector<2x256xf32> to vector<2x1x256xf32>
    %cst_2 = arith.constant 4.000000e+00 : f32
    %3 = vector.broadcast %cst_2 : f32 to vector<2x1x256xf32>
    %4 = arith.divf %2, %3 : vector<2x1x256xf32>
    %5 = arith.mulf %0, %0 : vector<2x4x256xf32>
    %cst_3 = arith.constant dense<0.000000e+00> : vector<2x256xf32>
    %6 = vector.multi_reduction <add>, %5, %cst_3 [1] : vector<2x4x256xf32> to vector<2x256xf32>
    %7 = vector.shape_cast %6 : vector<2x256xf32> to vector<2x1x256xf32>
    %cst_4 = arith.constant 4.000000e+00 : f32
    %8 = vector.broadcast %cst_4 : f32 to vector<2x1x256xf32>
    %9 = arith.divf %7, %8 : vector<2x1x256xf32>
    %10 = arith.mulf %4, %4 : vector<2x1x256xf32>
    %11 = arith.subf %9, %10 : vector<2x1x256xf32>
    %cst_5 = arith.constant 0.000000e+00 : f32
    %12 = vector.broadcast %cst_5 : f32 to vector<2x1x256xf32>
    %13 = arith.maximumf %11, %12 : vector<2x1x256xf32>
    %cst_6 = arith.constant 9.99999974E-6 : f32
    %14 = vector.broadcast %cst_6 : f32 to vector<2x1x256xf32>
    %15 = arith.addf %13, %14 : vector<2x1x256xf32>
    %16 = math.rsqrt %15 : vector<2x1x256xf32>
    %c0_7 = arith.constant 0 : index
    %c0_8 = arith.constant 0 : index
    %17 = vector.load %arg2[%c0_7, %c0_8] : memref<4x1xf32, #tpu.memory_space<vmem>>, vector<4x1xf32>
    %18 = vector.shape_cast %17 : vector<4x1xf32> to vector<1x4x1xf32>
    %c0_9 = arith.constant 0 : index
    %c0_10 = arith.constant 0 : index
    %19 = vector.load %arg3[%c0_9, %c0_10] : memref<4x1xf32, #tpu.memory_space<vmem>>, vector<4x1xf32>
    %20 = vector.shape_cast %19 : vector<4x1xf32> to vector<1x4x1xf32>
    %21 = vector.broadcast %4 : vector<2x1x256xf32> to vector<2x4x256xf32>
    %22 = arith.subf %0, %21 : vector<2x4x256xf32>
    %23 = vector.broadcast %16 : vector<2x1x256xf32> to vector<2x4x256xf32>
    %24 = arith.mulf %22, %23 : vector<2x4x256xf32>
    %25 = vector.broadcast %18 : vector<1x4x1xf32> to vector<2x4x256xf32>
    %26 = arith.mulf %24, %25 : vector<2x4x256xf32>
    %27 = vector.broadcast %20 : vector<1x4x1xf32> to vector<2x4x256xf32>
    %28 = arith.addf %26, %27 : vector<2x4x256xf32>
    %c0_11 = arith.constant 0 : index
    %c0_12 = arith.constant 0 : index
    %c0_13 = arith.constant 0 : index
    %29 = vector.load %arg4[%c0_11, %c0_12, %c0_13] : memref<2x4x256xf32, #tpu.memory_space<vmem>>, vector<2x4x256xf32>
    tpu.vector_store %arg4[%c0_11, %c0_12, %c0_13], %28 {strides = array<i32>} : memref<2x4x256xf32, #tpu.memory_space<vmem>>, vector<2x4x256xf32>,
    return
  }
  func.func @transform_0(%arg0: i32) -> (i32, i32, i32) {
    %c0_i32 = arith.constant 0 : i32
    %c0_i32_0 = arith.constant 0 : i32
    %c0_i32_1 = arith.constant 0 : i32
    return %arg0, %c0_i32, %c0_i32_0 : i32, i32, i32
  }
  func.func @transform_1(%arg0: i32) -> (i32, i32) {
    %c0_i32 = arith.constant 0 : i32
    %c0_i32_0 = arith.constant 0 : i32
    %c0_i32_1 = arith.constant 0 : i32
    return %c0_i32, %c0_i32_0 : i32, i32
  }
  func.func @transform_2(%arg0: i32) -> (i32, i32) {
    %c0_i32 = arith.constant 0 : i32
    %c0_i32_0 = arith.constant 0 : i32
    %c0_i32_1 = arith.constant 0 : i32
    return %c0_i32, %c0_i32_0 : i32, i32
  }
  func.func @transform_3(%arg0: i32) -> (i32, i32, i32) {
    %c0_i32 = arith.constant 0 : i32
    %c0_i32_0 = arith.constant 0 : i32
    %c0_i32_1 = arith.constant 0 : i32
    return %arg0, %c0_i32, %c0_i32_0 : i32, i32, i32
  }
}

</mosaic_0001>

<llo_original>
// kernel: tpu_custom_call.1
$region0: #{tpu_custom_call.1}
  #allocation0 [shape = 'u32[]', space=smem, size = 0x4, offset = 0x4, fixed_abs, tag = 'smem constant byte address 0x4 - core index']
  #allocation1 [shape = 'u32[144,128]{1,0:T(1,128)}', space=vmem, size = 0x12000, scoped, tag = 'internal scratch']
  %s0 = inlined_call_operand.hbm [shape: f32[2,4,256], index: 0, kind: input, shape index: {}]
  %s1 = inlined_call_operand.vmem [shape: f32[4,1], index: 1, kind: input, shape index: {}]
  %s2 = inlined_call_operand.vmem [shape: f32[4,1], index: 2, kind: input, shape index: {}]
  %s3 = inlined_call_operand.hbm [shape: f32[2,4,256], index: 3, kind: output, shape index: {}]
  %s4 = sld [smem:[#allocation0]]
  $region26: #{tpu_custom_call.1} parent=0
    _
  %s6 = ssub.s32 1, %s4
  %s7 = scalar_select 0, %s6, %s4
  $region1: #{tpu_custom_call.1} parent=0
    #allocation2 [shape = 'u8[8192]{0}', space=vmem, size = 0x2000, scoped, tag = 'input window, operand 0, single buffered']
    #allocation3 [shape = 's32[1]{0}', space=sflag, size = 0x4, scoped, tag = 'scoped memory for tpu_custom_call.1']
    #allocation4 [shape = 's32[1]{0}', space=sflag, size = 0x4, scoped, tag = 'scoped memory for tpu_custom_call.1']
    #allocation5 [shape = 'u8[8192]{0}', space=vmem, size = 0x2000, scoped, tag = 'output window, operand 0, single buffered']
    %8 = vsyncpa [#allocation3], 0
    %9 = vsyncpa [#allocation4], 0
    // Predicated region
    $region2: #{tpu_custom_call.1} parent=1 // pred_check
      _
    $region3: #{tpu_custom_call.1} parent=1 // pred_check_branch
      %11 = sbr.rel (0) target = $region5
    $region4: #{tpu_custom_call.1} parent=1 // pred_region
      %s13 = ssub.s32 256, 256
      %14 = vsyncadd [#allocation3], %s13
      %s15 = sshll.u32 [#allocation2], 4
      %s16 = int_to_ptr.vmem [resolvable:$true] %s15
      %21 = dma.hbm_to_vmem [thread:$0]  %s0, 256, %s16, [#allocation3], 128, 128, 8
    $region5: #{tpu_custom_call.1} parent=1 // pred_fallthru
      _
    // Predicated region
    $region6: #{tpu_custom_call.1} parent=1 // pred_check
      _
    $region7: #{tpu_custom_call.1} parent=1 // pred_check_branch
      %23 = sbr.rel (0) target = $region9
    $region8: #{tpu_custom_call.1} parent=1 // pred_region
      _
    $region9: #{tpu_custom_call.1} parent=1 // pred_fallthru
      _
    // Predicated region
    $region10: #{tpu_custom_call.1} parent=1 // pred_check
      _
    $region11: #{tpu_custom_call.1} parent=1 // pred_check_branch
      %25 = sbr.rel (0) target = $region13
    $region12: #{tpu_custom_call.1} parent=1 // pred_region
      _
    $region13: #{tpu_custom_call.1} parent=1 // pred_fallthru
      _
    // Predicated region
    $region14: #{tpu_custom_call.1} parent=1 // pred_check
      _
    $region15: #{tpu_custom_call.1} parent=1 // pred_check_branch
      %27 = sbr.rel (0) target = $region17
    $region16: #{tpu_custom_call.1} parent=1 // pred_region
      %28 = dma.done [#allocation3], 256
    $region17: #{tpu_custom_call.1} parent=1 // pred_fallthru
      _
    %v29 = vld [vmem:[#allocation2] sm:$0xff]
    %v30 = vld [vmem:[#allocation2 + $0x8] sm:$0xff]
    %v33 = vcombine.high %v29, %v29
    %v34 = vcombine.high %v30, %v30
    %vm37 = vcmask 1043456
    %v38 = vsel %vm37, %v29, 0.0
    %v39 = vrot.slane %v38, 4
    %v40 = vadd.f32 %v38, %v39
    %v41 = vrot.slane %v40, 2
    %v42 = vadd.f32 %v40, %v41
    %v43 = vrot.slane %v42, 1
    %v44 = vadd.f32 %v42, %v43
    %v45 = vsel %vm37, %v33, 0.0
    %v46 = vrot.slane %v45, 4
    %v47 = vadd.f32 %v45, %v46
    %v48 = vrot.slane %v47, 2
    %v49 = vadd.f32 %v47, %v48
    %v50 = vrot.slane %v49, 1
    %v51 = vadd.f32 %v49, %v50
    %v52 = vsel %vm37, %v30, 0.0
    %v53 = vrot.slane %v52, 4
    %v54 = vadd.f32 %v52, %v53
    %v55 = vrot.slane %v54, 2
    %v56 = vadd.f32 %v54, %v55
    %v57 = vrot.slane %v56, 1
    %v58 = vadd.f32 %v56, %v57
    %v59 = vsel %vm37, %v34, 0.0
    %v60 = vrot.slane %v59, 4
    %v61 = vadd.f32 %v59, %v60
    %v62 = vrot.slane %v61, 2
    %v63 = vadd.f32 %v61, %v62
    %v64 = vrot.slane %v63, 1
    %v65 = vadd.f32 %v63, %v64
    %v66 = vrcp.pop 4.0
    %v67 = vmul.f32 %v44, %v66
    %v68 = vmul.f32 %v51, %v66
    %v69 = vmul.f32 %v58, %v66
    %v70 = vmul.f32 %v65, %v66
    %v71 = vmul.f32 %v29, %v29
    %v72 = vmul.f32 %v30, %v30
    %v75 = vcombine.high %v71, %v71
    %v76 = vcombine.high %v72, %v72
    %v79 = vsel %vm37, %v71, 0.0
    %v80 = vrot.slane %v79, 4
    %v81 = vadd.f32 %v79, %v80
    %v82 = vrot.slane %v81, 2
    %v83 = vadd.f32 %v81, %v82
    %v84 = vrot.slane %v83, 1
    %v85 = vadd.f32 %v83, %v84
    %v86 = vsel %vm37, %v75, 0.0
    %v87 = vrot.slane %v86, 4
    %v88 = vadd.f32 %v86, %v87
    %v89 = vrot.slane %v88, 2
    %v90 = vadd.f32 %v88, %v89
    %v91 = vrot.slane %v90, 1
    %v92 = vadd.f32 %v90, %v91
    %v93 = vsel %vm37, %v72, 0.0
    %v94 = vrot.slane %v93, 4
    %v95 = vadd.f32 %v93, %v94
    %v96 = vrot.slane %v95, 2
    %v97 = vadd.f32 %v95, %v96
    %v98 = vrot.slane %v97, 1
    %v99 = vadd.f32 %v97, %v98
    %v100 = vsel %vm37, %v76, 0.0
    %v101 = vrot.slane %v100, 4
    %v102 = vadd.f32 %v100, %v101
    %v103 = vrot.slane %v102, 2
    %v104 = vadd.f32 %v102, %v103
    %v105 = vrot.slane %v104, 1
    %v106 = vadd.f32 %v104, %v105
    %v107 = vmul.f32 %v85, %v66
    %v108 = vmul.f32 %v92, %v66
    %v109 = vmul.f32 %v99, %v66
    %v110 = vmul.f32 %v106, %v66
    %v111 = vmul.f32 %v67, %v67
    %v112 = vmul.f32 %v68, %v68
    %v113 = vmul.f32 %v69, %v69
    %v114 = vmul.f32 %v70, %v70
    %v115 = vsub.f32 %v107, %v111
    %v116 = vsub.f32 %v108, %v112
    %v117 = vsub.f32 %v109, %v113
    %v118 = vsub.f32 %v110, %v114
    %v119 = vmax.f32 %v115, 0.0
    %v120 = vmax.f32 %v116, 0.0
    %v121 = vmax.f32 %v117, 0.0
    %v122 = vmax.f32 %v118, 0.0
    %v123 = vadd.f32 %v119, 1e-05
    %v124 = vadd.f32 %v120, 1e-05
    %v125 = vadd.f32 %v121, 1e-05
    %v126 = vadd.f32 %v122, 1e-05
    %v127 = vrsqrt.pop %v123
    %v128 = vrsqrt.pop %v124
    %v129 = vrsqrt.pop %v125
    %v130 = vrsqrt.pop %v126
    %v131 = vld [vmem:[%s1] sm:$0xf]
    %v132 = vld [vmem:[%s2] sm:$0xf]
    %v137 = vcombine.low %v67, %v68
    %v138 = vcombine.low %v69, %v70
    %v141 = vsub.f32 %v29, %v137
    %v142 = vsub.f32 %v30, %v138
    %v147 = vcombine.low %v127, %v128
    %v148 = vcombine.low %v129, %v130
    %v151 = vmul.f32 %v141, %v147
    %v152 = vmul.f32 %v142, %v148
    %154 = vset.pattern.permute.xlu0 0
    %155 = vperm.xlu0 %154, %v131
    %v156 = vpop.permute.xlu0 %155
    %v158 = vunpack.c.l.s4 839922192
    %v159 = vunpack.c.0.s8 %v158
    %v160 = vlaneseq
    %v161 = vshrl.u32 %v160, 7
    %v162 = vsub.s32 %v159, %v161
    %v163 = vrot.slane %v156, %v162
    %v165 = vmul.f32 %v151, %v163
    %v166 = vmul.f32 %v152, %v163
    %168 = vset.pattern.permute.xlu0 0
    %169 = vperm.xlu0 %168, %v132
    %v170 = vpop.permute.xlu0 %169
    %v172 = vunpack.c.l.s4 839922192
    %v173 = vunpack.c.0.s8 %v172
    %v174 = vlaneseq
    %v175 = vshrl.u32 %v174, 7
    %v176 = vsub.s32 %v173, %v175
    %v177 = vrot.slane %v170, %v176
    %v179 = vadd.f32 %v165, %v177
    %v180 = vadd.f32 %v166, %v177
    %181 = vst [vmem:[#allocation5] sm:$0xff] %v179
    %182 = vst [vmem:[#allocation5 + $0x8] sm:$0xff] %v180
    // Predicated region
    $region18: #{tpu_custom_call.1} parent=1 // pred_check
      _
    $region19: #{tpu_custom_call.1} parent=1 // pred_check_branch
      %184 = sbr.rel (0) target = $region21
    $region20: #{tpu_custom_call.1} parent=1 // pred_region
      %s186 = ssub.s32 256, 256
      %187 = vsyncadd [#allocation4], %s186
      %s188 = sshll.u32 [#allocation5], 4
      %s189 = int_to_ptr.vmem [resolvable:$true] %s188
      %194 = dma.vmem_to_hbm [thread:$0]  %s189, 256, %s3, [#allocation4], 128, 128, 8
    $region21: #{tpu_custom_call.1} parent=1 // pred_fallthru
      _
    // Predicated region
    $region22: #{tpu_custom_call.1} parent=1 // pred_check
      _
    $region23: #{tpu_custom_call.1} parent=1 // pred_check_branch
      %196 = sbr.rel (0) target = $region25
    $region24: #{tpu_custom_call.1} parent=1 // pred_region
      %197 = dma.done [#allocation4], 256
    $region25: #{tpu_custom_call.1} parent=1 // pred_fallthru
      _
    %198 = vsyncpa [#allocation3], 1
    %199 = vsyncpa [#allocation4], 1

</llo_original>
